<compile_context>
chip_gen: v5e
topology: v5e:2x2
jax: 0.10.0
libtpu: 0.0.40
codegen_flags: <defaults>
</compile_context>

<pallas_src>
import jax
import jax.numpy as jnp
from jax.experimental import pallas as pl
from jax.experimental.pallas import tpu as pltpu


def _round_up(n, m):
    return ((n + m - 1) // m) * m


def zeronet_kernel(x_ref,
                   w1_ref, b1_ref,
                   w2_ref, b2_ref,
                   w3_ref, b3_ref,
                   w4_ref, b4_ref,
                   o_ref):
    # In-kernel f32 -> bf16 cast of the batch tile (free under MXU/DMA slots).
    x = x_ref[...].astype(jnp.bfloat16)
    # Layer 1: Linear + ReLU (bf16 MXU inputs, f32 accumulation)
    h = jnp.dot(x, w1_ref[...], preferred_element_type=jnp.float32)
    h = jnp.maximum(h + b1_ref[...], 0.0).astype(jnp.bfloat16)
    # Layer 2: Linear + ReLU
    h = jnp.dot(h, w2_ref[...], preferred_element_type=jnp.float32)
    h = jnp.maximum(h + b2_ref[...], 0.0).astype(jnp.bfloat16)
    # Layer 3: Linear + ReLU
    h = jnp.dot(h, w3_ref[...], preferred_element_type=jnp.float32)
    h = jnp.maximum(h + b3_ref[...], 0.0).astype(jnp.bfloat16)
    # Layer 4 (head): Linear, no activation
    h = jnp.dot(h, w4_ref[...], preferred_element_type=jnp.float32)
    o_ref[...] = (h + b4_ref[...]).astype(o_ref.dtype)


def _as_bf16(a):
    return a if a.dtype == jnp.bfloat16 else a.astype(jnp.bfloat16)


def prepare_params(params):
    """Cast weights to bf16 ONCE (hoisted out of the per-call path). Biases stay f32."""
    prepared = dict(params)
    for i in range(1, 5):
        prepared[f"w{i}"] = _as_bf16(params[f"w{i}"])
    return prepared


def _choose_tile(batch, batch_tile):
    # Multiple of 16 rows (bf16 sublane packing). At least 2 grid steps whenever the
    # batch allows it so both v7x TensorCores get work; large batches use ~batch_tile
    # rows per step to amortize the ~0.35us per-step overhead and MXU fill/drain.
    nsteps = max(2, pl.cdiv(batch, batch_tile))
    return max(16, _round_up(pl.cdiv(batch, nsteps), 16))


def zeronet_forward(x, params, *, batch_tile=2048):
    """x: [B, input_dim] float32. params: w1..w4 ([in,out]) and b1..b4 ([1,out] f32).

    Weights may be f32 or already-prepared bf16 (see prepare_params); they are only
    cast here if needed.
    """
    B, input_dim = x.shape
    l1 = params["w1"].shape[1]
    l2 = params["w2"].shape[1]
    l3 = params["w3"].shape[1]
    out_dim = params["w4"].shape[1]

    w1, w2, w3, w4 = (_as_bf16(params[f"w{i}"]) for i in range(1, 5))
    b1, b2, b3, b4 = params["b1"], params["b2"], params["b3"], params["b4"]

    tile = _choose_tile(B, batch_tile)
    grid = (pl.cdiv(B, tile),)  # last block may be partial; OOB writes are masked

    def full_spec(arr):
        # Full-array block, constant index_map -> VMEM-resident across grid steps.
        return pl.BlockSpec(arr.shape, lambda i: (0, 0))

    in_specs = [
        pl.BlockSpec((tile, input_dim), lambda i: (i, 0)),
        full_spec(w1), full_spec(b1),
        full_spec(w2), full_spec(b2),
        full_spec(w3), full_spec(b3),
        full_spec(w4), full_spec(b4),
    ]
    out_spec = pl.BlockSpec((tile, out_dim), lambda i: (i, 0))

    flops = 2 * B * (input_dim * l1 + l1 * l2 + l2 * l3 + l3 * out_dim)
    weight_bytes = sum(int(w.size) * w.dtype.itemsize for w in (w1, w2, w3, w4)) + \
                   sum(int(b.size) * b.dtype.itemsize for b in (b1, b2, b3, b4))
    bytes_accessed = int(x.size) * x.dtype.itemsize + B * out_dim * 4 + weight_bytes

    out = pl.pallas_call(
        zeronet_kernel,
        out_shape=jax.ShapeDtypeStruct((B, out_dim), jnp.float32),
        grid=grid,
        in_specs=in_specs,
        out_specs=out_spec,
        compiler_params=pltpu.CompilerParams(
            dimension_semantics=("parallel",),
        ),
        cost_estimate=pl.CostEstimate(
            flops=flops, transcendentals=0, bytes_accessed=bytes_accessed),
    )(x, w1, b1, w2, b2, w3, b3, w4, b4)

    return out


def init_params(key, input_dim, layer1_dim, layer2_dim, layer3_dim, num_classes):
    """Deterministic synthetic init (PyTorch-style uniform bounds: U(-1/sqrt(fan_in), +))."""
    dims = [input_dim, layer1_dim, layer2_dim, layer3_dim, num_classes + 1]
    params = {}
    for idx in range(4):
        fan_in, fan_out = dims[idx], dims[idx + 1]
        key, kw, kb = jax.random.split(key, 3)
        bound = 1.0 / jnp.sqrt(jnp.float32(fan_in))
        params[f"w{idx+1}"] = jax.random.uniform(
            kw, (fan_in, fan_out), jnp.float32, minval=-bound, maxval=bound)
        params[f"b{idx+1}"] = jax.random.uniform(
            kb, (1, fan_out), jnp.float32, minval=-bound, maxval=bound)
    return params


def zeronet_ref(x, params):
    """Pure-JAX reference mirroring the kernel numerics (bf16 MXU inputs, f32 accumulation)."""
    xb = x.astype(jnp.bfloat16)
    w1, w2, w3, w4 = (_as_bf16(params[f"w{i}"]) for i in range(1, 5))
    h = jnp.dot(xb, w1, preferred_element_type=jnp.float32) + params["b1"]
    h = jnp.maximum(h, 0.0).astype(jnp.bfloat16)
    h = jnp.dot(h, w2, preferred_element_type=jnp.float32) + params["b2"]
    h = jnp.maximum(h, 0.0).astype(jnp.bfloat16)
    h = jnp.dot(h, w3, preferred_element_type=jnp.float32) + params["b3"]
    h = jnp.maximum(h, 0.0).astype(jnp.bfloat16)
    return jnp.dot(h, w4, preferred_element_type=jnp.float32) + params["b4"]


if __name__ == "__main__":
    # Small shapes consistent with the module's forward: x is [batch, input_dim].
    input_dim, layer1_dim, layer2_dim, layer3_dim, num_classes = 32, 64, 64, 32, 9
    out_dim = num_classes + 1

    key = jax.random.PRNGKey(0)
    params = init_params(key, input_dim, layer1_dim, layer2_dim, layer3_dim, num_classes)
    prepared = prepare_params(params)  # bf16 weight cast happens exactly once

    # Two batch sizes: a tiny one and an odd-sized one, both exercising the ragged
    # (non-divisible) last block without any jnp.pad copy of x.
    for batch in (20, 300):
        key, kx = jax.random.split(key)
        x = jax.random.normal(kx, (batch, input_dim), jnp.float32)

        out = zeronet_forward(x, prepared, batch_tile=2048)
        out = jax.block_until_ready(out)

        ref = zeronet_ref(x, params)
        assert out.shape == (batch, out_dim), out.shape
        assert jnp.allclose(out, ref, atol=1e-3, rtol=1e-3), \
            f"mismatch vs pure-JAX reference (batch={batch})"

    print("KERNEL_OK")
</pallas_src>

<mosaic_0001>
module attributes {stable_mosaic.version = 11 : i64} {
  func.func @zeronet_kernel(%arg0: i32, %arg1: memref<16x32xf32, #tpu.memory_space<vmem>>, %arg2: memref<32x64xbf16, #tpu.memory_space<vmem>>, %arg3: memref<1x64xf32, #tpu.memory_space<vmem>>, %arg4: memref<64x64xbf16, #tpu.memory_space<vmem>>, %arg5: memref<1x64xf32, #tpu.memory_space<vmem>>, %arg6: memref<64x32xbf16, #tpu.memory_space<vmem>>, %arg7: memref<1x32xf32, #tpu.memory_space<vmem>>, %arg8: memref<32x10xbf16, #tpu.memory_space<vmem>>, %arg9: memref<1x10xf32, #tpu.memory_space<vmem>>, %arg10: memref<16x10xf32, #tpu.memory_space<vmem>>) attributes {dimension_semantics = [#tpu.dimension_semantics<parallel>], iteration_bounds = array<i64: 2>, scalar_prefetch = 0 : i64, scratch_operands = 0 : i64, tpu.core_type = #tpu.core_type<tc>, window_params = [{transform_indices = @transform_0, window_bounds = array<i64: 16, 32>}, {pipeline_mode = #tpu.pipeline_mode<synchronous>, transform_indices = @transform_1, window_bounds = array<i64: 32, 64>}, {pipeline_mode = #tpu.pipeline_mode<synchronous>, transform_indices = @transform_2, window_bounds = array<i64: 1, 64>}, {pipeline_mode = #tpu.pipeline_mode<synchronous>, transform_indices = @transform_3, window_bounds = array<i64: 64, 64>}, {pipeline_mode = #tpu.pipeline_mode<synchronous>, transform_indices = @transform_4, window_bounds = array<i64: 1, 64>}, {pipeline_mode = #tpu.pipeline_mode<synchronous>, transform_indices = @transform_5, window_bounds = array<i64: 64, 32>}, {pipeline_mode = #tpu.pipeline_mode<synchronous>, transform_indices = @transform_6, window_bounds = array<i64: 1, 32>}, {pipeline_mode = #tpu.pipeline_mode<synchronous>, transform_indices = @transform_7, window_bounds = array<i64: 32, 10>}, {pipeline_mode = #tpu.pipeline_mode<synchronous>, transform_indices = @transform_8, window_bounds = array<i64: 1, 10>}, {transform_indices = @transform_9, window_bounds = array<i64: 16, 10>}]} {
    %c0 = arith.constant 0 : index
    %c0_0 = arith.constant 0 : index
    %0 = vector.load %arg1[%c0, %c0_0] : memref<16x32xf32, #tpu.memory_space<vmem>>, vector<16x32xf32>
    %1 = arith.truncf %0 : vector<16x32xf32> to vector<16x32xbf16>
    %c0_1 = arith.constant 0 : index
    %c0_2 = arith.constant 0 : index
    %2 = vector.load %arg2[%c0_1, %c0_2] : memref<32x64xbf16, #tpu.memory_space<vmem>>, vector<32x64xbf16>
    %cst = arith.constant dense<0.000000e+00> : vector<16x64xf32>
    %3 = tpu.matmul %1, %2, %cst {dimension_numbers = #tpu.dot_dimension_numbers<[1], [0], [0], [1], [0, 0, 1, 1], [], []>} : vector<16x32xbf16>, vector<32x64xbf16>, vector<16x64xf32> -> vector<16x64xf32>
    %c0_3 = arith.constant 0 : index
    %c0_4 = arith.constant 0 : index
    %4 = vector.load %arg3[%c0_3, %c0_4] : memref<1x64xf32, #tpu.memory_space<vmem>>, vector<1x64xf32>
    %5 = vector.broadcast %4 : vector<1x64xf32> to vector<16x64xf32>
    %6 = arith.addf %3, %5 : vector<16x64xf32>
    %cst_5 = arith.constant 0.000000e+00 : f32
    %7 = vector.broadcast %cst_5 : f32 to vector<16x64xf32>
    %8 = arith.maximumf %6, %7 : vector<16x64xf32>
    %9 = arith.truncf %8 : vector<16x64xf32> to vector<16x64xbf16>
    %c0_6 = arith.constant 0 : index
    %c0_7 = arith.constant 0 : index
    %10 = vector.load %arg4[%c0_6, %c0_7] : memref<64x64xbf16, #tpu.memory_space<vmem>>, vector<64x64xbf16>
    %cst_8 = arith.constant dense<0.000000e+00> : vector<16x64xf32>
    %11 = tpu.matmul %9, %10, %cst_8 {dimension_numbers = #tpu.dot_dimension_numbers<[1], [0], [0], [1], [0, 0, 1, 1], [], []>} : vector<16x64xbf16>, vector<64x64xbf16>, vector<16x64xf32> -> vector<16x64xf32>
    %c0_9 = arith.constant 0 : index
    %c0_10 = arith.constant 0 : index
    %12 = vector.load %arg5[%c0_9, %c0_10] : memref<1x64xf32, #tpu.memory_space<vmem>>, vector<1x64xf32>
    %13 = vector.broadcast %12 : vector<1x64xf32> to vector<16x64xf32>
    %14 = arith.addf %11, %13 : vector<16x64xf32>
    %cst_11 = arith.constant 0.000000e+00 : f32
    %15 = vector.broadcast %cst_11 : f32 to vector<16x64xf32>
    %16 = arith.maximumf %14, %15 : vector<16x64xf32>
    %17 = arith.truncf %16 : vector<16x64xf32> to vector<16x64xbf16>
    %c0_12 = arith.constant 0 : index
    %c0_13 = arith.constant 0 : index
    %18 = vector.load %arg6[%c0_12, %c0_13] : memref<64x32xbf16, #tpu.memory_space<vmem>>, vector<64x32xbf16>
    %cst_14 = arith.constant dense<0.000000e+00> : vector<16x32xf32>
    %19 = tpu.matmul %17, %18, %cst_14 {dimension_numbers = #tpu.dot_dimension_numbers<[1], [0], [0], [1], [0, 0, 1, 1], [], []>} : vector<16x64xbf16>, vector<64x32xbf16>, vector<16x32xf32> -> vector<16x32xf32>
    %c0_15 = arith.constant 0 : index
    %c0_16 = arith.constant 0 : index
    %20 = vector.load %arg7[%c0_15, %c0_16] : memref<1x32xf32, #tpu.memory_space<vmem>>, vector<1x32xf32>
    %21 = vector.broadcast %20 : vector<1x32xf32> to vector<16x32xf32>
    %22 = arith.addf %19, %21 : vector<16x32xf32>
    %cst_17 = arith.constant 0.000000e+00 : f32
    %23 = vector.broadcast %cst_17 : f32 to vector<16x32xf32>
    %24 = arith.maximumf %22, %23 : vector<16x32xf32>
    %25 = arith.truncf %24 : vector<16x32xf32> to vector<16x32xbf16>
    %c0_18 = arith.constant 0 : index
    %c0_19 = arith.constant 0 : index
    %26 = vector.load %arg8[%c0_18, %c0_19] : memref<32x10xbf16, #tpu.memory_space<vmem>>, vector<32x10xbf16>
    %cst_20 = arith.constant dense<0.000000e+00> : vector<16x10xf32>
    %27 = tpu.matmul %25, %26, %cst_20 {dimension_numbers = #tpu.dot_dimension_numbers<[1], [0], [0], [1], [0, 0, 1, 1], [], []>} : vector<16x32xbf16>, vector<32x10xbf16>, vector<16x10xf32> -> vector<16x10xf32>
    %c0_21 = arith.constant 0 : index
    %c0_22 = arith.constant 0 : index
    %28 = vector.load %arg9[%c0_21, %c0_22] : memref<1x10xf32, #tpu.memory_space<vmem>>, vector<1x10xf32>
    %29 = vector.broadcast %28 : vector<1x10xf32> to vector<16x10xf32>
    %30 = arith.addf %27, %29 : vector<16x10xf32>
    %c0_23 = arith.constant 0 : index
    %c0_24 = arith.constant 0 : index
    %31 = vector.load %arg10[%c0_23, %c0_24] : memref<16x10xf32, #tpu.memory_space<vmem>>, vector<16x10xf32>
    tpu.vector_store %arg10[%c0_23, %c0_24], %30 {strides = array<i32>} : memref<16x10xf32, #tpu.memory_space<vmem>>, vector<16x10xf32>,
    return
  }
  func.func @transform_0(%arg0: i32) -> (i32, i32) {
    %c0_i32 = arith.constant 0 : i32
    %c0_i32_0 = arith.constant 0 : i32
    return %arg0, %c0_i32 : i32, i32
  }
  func.func @transform_1(%arg0: i32) -> (i32, i32) {
    %c0_i32 = arith.constant 0 : i32
    %c0_i32_0 = arith.constant 0 : i32
    %c0_i32_1 = arith.constant 0 : i32
    return %c0_i32, %c0_i32_0 : i32, i32
  }
  func.func @transform_2(%arg0: i32) -> (i32, i32) {
    %c0_i32 = arith.constant 0 : i32
    %c0_i32_0 = arith.constant 0 : i32
    %c0_i32_1 = arith.constant 0 : i32
    return %c0_i32, %c0_i32_0 : i32, i32
  }
  func.func @transform_3(%arg0: i32) -> (i32, i32) {
    %c0_i32 = arith.constant 0 : i32
    %c0_i32_0 = arith.constant 0 : i32
    %c0_i32_1 = arith.constant 0 : i32
    return %c0_i32, %c0_i32_0 : i32, i32
  }
  func.func @transform_4(%arg0: i32) -> (i32, i32) {
    %c0_i32 = arith.constant 0 : i32
    %c0_i32_0 = arith.constant 0 : i32
    %c0_i32_1 = arith.constant 0 : i32
    return %c0_i32, %c0_i32_0 : i32, i32
  }
  func.func @transform_5(%arg0: i32) -> (i32, i32) {
    %c0_i32 = arith.constant 0 : i32
    %c0_i32_0 = arith.constant 0 : i32
    %c0_i32_1 = arith.constant 0 : i32
    return %c0_i32, %c0_i32_0 : i32, i32
  }
  func.func @transform_6(%arg0: i32) -> (i32, i32) {
    %c0_i32 = arith.constant 0 : i32
    %c0_i32_0 = arith.constant 0 : i32
    %c0_i32_1 = arith.constant 0 : i32
    return %c0_i32, %c0_i32_0 : i32, i32
  }
  func.func @transform_7(%arg0: i32) -> (i32, i32) {
    %c0_i32 = arith.constant 0 : i32
    %c0_i32_0 = arith.constant 0 : i32
    %c0_i32_1 = arith.constant 0 : i32
    return %c0_i32, %c0_i32_0 : i32, i32
  }
  func.func @transform_8(%arg0: i32) -> (i32, i32) {
    %c0_i32 = arith.constant 0 : i32
    %c0_i32_0 = arith.constant 0 : i32
    %c0_i32_1 = arith.constant 0 : i32
    return %c0_i32, %c0_i32_0 : i32, i32
  }
  func.func @transform_9(%arg0: i32) -> (i32, i32) {
    %c0_i32 = arith.constant 0 : i32
    %c0_i32_0 = arith.constant 0 : i32
    return %arg0, %c0_i32 : i32, i32
  }
}

</mosaic_0001>

<llo_original>
// kernel: tpu_custom_call.1
$region0: #{tpu_custom_call.1}
  #allocation0 [shape = 'u32[]', space=smem, size = 0x4, offset = 0x4, fixed_abs, tag = 'smem constant byte address 0x4 - core index']
  #allocation1 [shape = 'u32[72,128]{1,0:T(1,128)}', space=vmem, size = 0x9000, scoped, tag = 'internal scratch']
  %s0 = inlined_call_operand.vmem [shape: f32[20,32], index: 0, kind: input, shape index: {}]
  %s1 = inlined_call_operand.hbm [shape: bf16[32,64], index: 1, kind: input, shape index: {}]
  %s2 = inlined_call_operand.vmem [shape: f32[1,64], index: 2, kind: input, shape index: {}]
  %s3 = inlined_call_operand.vmem [shape: bf16[64,64], index: 3, kind: input, shape index: {}]
  %s4 = inlined_call_operand.vmem [shape: f32[1,64], index: 4, kind: input, shape index: {}]
  %s5 = inlined_call_operand.vmem [shape: bf16[64,32], index: 5, kind: input, shape index: {}]
  %s6 = inlined_call_operand.vmem [shape: f32[1,32], index: 6, kind: input, shape index: {}]
  %s7 = inlined_call_operand.vmem [shape: bf16[32,10], index: 7, kind: input, shape index: {}]
  %s8 = inlined_call_operand.vmem [shape: f32[1,10], index: 8, kind: input, shape index: {}]
  %s9 = inlined_call_operand.vmem [shape: f32[20,10], index: 9, kind: output, shape index: {}]
  %s10 = sld [smem:[#allocation0]]
  $region121: #{tpu_custom_call.1} parent=0
    _
  %s12 = ssub.s32 1, %s10
  %s13 = scalar_select 0, %s12, %s10
  $region1: #{tpu_custom_call.1} parent=0
    #allocation2 [shape = 'u8[8192]{0}', space=vmem, size = 0x2000, scoped, tag = 'input window, operand 1, single buffered']
    #allocation3 [shape = 's32[2]{0}', space=sflag, size = 0x8, scoped, tag = 'scoped memory for tpu_custom_call.1']
    #allocation4 [shape = 'u8[16384]{0}', space=vmem, size = 0x4000, scoped, tag = 'output window, operand 0']
    %14 = vsyncpa [#allocation3], 0
    loop: start=0, step=1, limit=4
    $region2: #{tpu_custom_call.1} parent=1 // loop_pre_header
      _
    $region3: #{tpu_custom_call.1} parent=1 // loop_header
      %s16 = sphi 0, %s20
      %p17 = scmp.ge.s32.totalorder %s16, 4
      %s26 = sphi 0, %s28
      %s29 = sphi 0, %s26
      %s30 = sphi 0, %s29
      %s46 = sphi 0, %s30
      %s50 = sphi 0, %s50
      %s52 = sphi 0, %s50
      %s53 = sphi 0, %s52
      %s67 = sphi 0, %s53
      %s71 = sphi 0, %s71
      %s73 = sphi 0, %s71
      %s74 = sphi 0, %s73
      %s88 = sphi 0, %s74
      %s92 = sphi 0, %s92
      %s94 = sphi 0, %s92
      %s95 = sphi 0, %s94
      %s109 = sphi 0, %s95
      %s113 = sphi 0, %s113
      %s115 = sphi 0, %s113
      %s116 = sphi 0, %s115
      %s130 = sphi 0, %s116
      %s134 = sphi 0, %s134
      %s136 = sphi 0, %s134
      %s137 = sphi 0, %s136
      %s151 = sphi 0, %s137
      %s155 = sphi 0, %s155
      %s157 = sphi 0, %s155
      %s158 = sphi 0, %s157
      %s172 = sphi 0, %s158
      %s176 = sphi 0, %s176
      %s178 = sphi 0, %s176
      %s179 = sphi 0, %s178
      %s193 = sphi 0, %s179
      %s197 = sphi 0, %s197
      %s199 = sphi 0, %s197
      %s200 = sphi 0, %s199
      %s214 = sphi 0, %s200
      %s220 = sphi 0, %s222
      %s223 = sphi 0, %s220
      %s224 = sphi 0, %s223
      %s240 = sphi 0, %s224
    $region4: #{tpu_custom_call.1} parent=1 // loop_header_branch
      %19 = sbr.rel (%p17) target = $region8
    $region5: #{tpu_custom_call.1} parent=1 // loop_body
      %s21 = ssub.s32 %s16, 1
      %s22 = ssub.s32 %s16, 2
      %s23 = sadd.s32 %s16, 1
      %s24 = ssub.s32 %s16, %s23
      %p25 = scmp.eq.s32.totalorder %s24, 0
      %s27 = sadd.s32 %s26, 1
      %s28 = scalar_select %p25, %s26, %s27
      %p31 = pneg %p25
      %p32 = scmp.eq.s32.totalorder %s16, 1
      %p33 = por %p31, %p32
      %p34 = scmp.ne.s32.totalorder %s26, %s29
      %p35 = scmp.eq.s32.totalorder %s16, 0
      %p36 = por %p34, %p35
      %p37 = scmp.ne.s32.totalorder %s26, %s29
      %p38 = scmp.eq.s32.totalorder %s21, 1
      %p39 = por %p37, %p38
      %p40 = scmp.ne.s32.totalorder %s29, %s30
      %p41 = scmp.eq.s32.totalorder %s21, 0
      %p42 = por %p40, %p41
      %p43 = scmp.ne.s32.totalorder %s29, %s30
      %p44 = scmp.eq.s32.totalorder %s22, 1
      %p45 = por %p43, %p44
      %p47 = scmp.ne.s32.totalorder %s30, %s46
      %p48 = scmp.eq.s32.totalorder %s22, 0
      %p49 = por %p47, %p48
      %s51 = sadd.s32 %s50, 1
      %p54 = scmp.eq.s32.totalorder %s16, 1
      %p55 = scmp.ne.s32.totalorder %s50, %s52
      %p56 = scmp.eq.s32.totalorder %s16, 0
      %p57 = por %p55, %p56
      %p58 = scmp.ne.s32.totalorder %s50, %s52
      %p59 = scmp.eq.s32.totalorder %s21, 1
      %p60 = por %p58, %p59
      %p61 = scmp.ne.s32.totalorder %s52, %s53
      %p62 = scmp.eq.s32.totalorder %s21, 0
      %p63 = por %p61, %p62
      %p64 = scmp.ne.s32.totalorder %s52, %s53
      %p65 = scmp.eq.s32.totalorder %s22, 1
      %p66 = por %p64, %p65
      %p68 = scmp.ne.s32.totalorder %s53, %s67
      %p69 = scmp.eq.s32.totalorder %s22, 0
      %p70 = por %p68, %p69
      %s72 = sadd.s32 %s71, 1
      %p75 = scmp.eq.s32.totalorder %s16, 1
      %p76 = scmp.ne.s32.totalorder %s71, %s73
      %p77 = scmp.eq.s32.totalorder %s16, 0
      %p78 = por %p76, %p77
      %p79 = scmp.ne.s32.totalorder %s71, %s73
      %p80 = scmp.eq.s32.totalorder %s21, 1
      %p81 = por %p79, %p80
      %p82 = scmp.ne.s32.totalorder %s73, %s74
      %p83 = scmp.eq.s32.totalorder %s21, 0
      %p84 = por %p82, %p83
      %p85 = scmp.ne.s32.totalorder %s73, %s74
      %p86 = scmp.eq.s32.totalorder %s22, 1
      %p87 = por %p85, %p86
      %p89 = scmp.ne.s32.totalorder %s74, %s88
      %p90 = scmp.eq.s32.totalorder %s22, 0
      %p91 = por %p89, %p90
      %s93 = sadd.s32 %s92, 1
      %p96 = scmp.eq.s32.totalorder %s16, 1
      %p97 = scmp.ne.s32.totalorder %s92, %s94
      %p98 = scmp.eq.s32.totalorder %s16, 0
      %p99 = por %p97, %p98
      %p100 = scmp.ne.s32.totalorder %s92, %s94
      %p101 = scmp.eq.s32.totalorder %s21, 1
      %p102 = por %p100, %p101
      %p103 = scmp.ne.s32.totalorder %s94, %s95
      %p104 = scmp.eq.s32.totalorder %s21, 0
      %p105 = por %p103, %p104
      %p106 = scmp.ne.s32.totalorder %s94, %s95
      %p107 = scmp.eq.s32.totalorder %s22, 1
      %p108 = por %p106, %p107
      %p110 = scmp.ne.s32.totalorder %s95, %s109
      %p111 = scmp.eq.s32.totalorder %s22, 0
      %p112 = por %p110, %p111
      %s114 = sadd.s32 %s113, 1
      %p117 = scmp.eq.s32.totalorder %s16, 1
      %p118 = scmp.ne.s32.totalorder %s113, %s115
      %p119 = scmp.eq.s32.totalorder %s16, 0
      %p120 = por %p118, %p119
      %p121 = scmp.ne.s32.totalorder %s113, %s115
      %p122 = scmp.eq.s32.totalorder %s21, 1
      %p123 = por %p121, %p122
      %p124 = scmp.ne.s32.totalorder %s115, %s116
      %p125 = scmp.eq.s32.totalorder %s21, 0
      %p126 = por %p124, %p125
      %p127 = scmp.ne.s32.totalorder %s115, %s116
      %p128 = scmp.eq.s32.totalorder %s22, 1
      %p129 = por %p127, %p128
      %p131 = scmp.ne.s32.totalorder %s116, %s130
      %p132 = scmp.eq.s32.totalorder %s22, 0
      %p133 = por %p131, %p132
      %s135 = sadd.s32 %s134, 1
      %p138 = scmp.eq.s32.totalorder %s16, 1
      %p139 = scmp.ne.s32.totalorder %s134, %s136
      %p140 = scmp.eq.s32.totalorder %s16, 0
      %p141 = por %p139, %p140
      %p142 = scmp.ne.s32.totalorder %s134, %s136
      %p143 = scmp.eq.s32.totalorder %s21, 1
      %p144 = por %p142, %p143
      %p145 = scmp.ne.s32.totalorder %s136, %s137
      %p146 = scmp.eq.s32.totalorder %s21, 0
      %p147 = por %p145, %p146
      %p148 = scmp.ne.s32.totalorder %s136, %s137
      %p149 = scmp.eq.s32.totalorder %s22, 1
      %p150 = por %p148, %p149
      %p152 = scmp.ne.s32.totalorder %s137, %s151
      %p153 = scmp.eq.s32.totalorder %s22, 0
      %p154 = por %p152, %p153
      %s156 = sadd.s32 %s155, 1
      %p159 = scmp.eq.s32.totalorder %s16, 1
      %p160 = scmp.ne.s32.totalorder %s155, %s157
      %p161 = scmp.eq.s32.totalorder %s16, 0
      %p162 = por %p160, %p161
      %p163 = scmp.ne.s32.totalorder %s155, %s157
      %p164 = scmp.eq.s32.totalorder %s21, 1
      %p165 = por %p163, %p164
      %p166 = scmp.ne.s32.totalorder %s157, %s158
      %p167 = scmp.eq.s32.totalorder %s21, 0
      %p168 = por %p166, %p167
      %p169 = scmp.ne.s32.totalorder %s157, %s158
      %p170 = scmp.eq.s32.totalorder %s22, 1
      %p171 = por %p169, %p170
      %p173 = scmp.ne.s32.totalorder %s158, %s172
      %p174 = scmp.eq.s32.totalorder %s22, 0
      %p175 = por %p173, %p174
      %s177 = sadd.s32 %s176, 1
      %p180 = scmp.eq.s32.totalorder %s16, 1
      %p181 = scmp.ne.s32.totalorder %s176, %s178
      %p182 = scmp.eq.s32.totalorder %s16, 0
      %p183 = por %p181, %p182
      %p184 = scmp.ne.s32.totalorder %s176, %s178
      %p185 = scmp.eq.s32.totalorder %s21, 1
      %p186 = por %p184, %p185
      %p187 = scmp.ne.s32.totalorder %s178, %s179
      %p188 = scmp.eq.s32.totalorder %s21, 0
      %p189 = por %p187, %p188
      %p190 = scmp.ne.s32.totalorder %s178, %s179
      %p191 = scmp.eq.s32.totalorder %s22, 1
      %p192 = por %p190, %p191
      %p194 = scmp.ne.s32.totalorder %s179, %s193
      %p195 = scmp.eq.s32.totalorder %s22, 0
      %p196 = por %p194, %p195
      %s198 = sadd.s32 %s197, 1
      %p201 = scmp.eq.s32.totalorder %s16, 1
      %p202 = scmp.ne.s32.totalorder %s197, %s199
      %p203 = scmp.eq.s32.totalorder %s16, 0
      %p204 = por %p202, %p203
      %p205 = scmp.ne.s32.totalorder %s197, %s199
      %p206 = scmp.eq.s32.totalorder %s21, 1
      %p207 = por %p205, %p206
      %p208 = scmp.ne.s32.totalorder %s199, %s200
      %p209 = scmp.eq.s32.totalorder %s21, 0
      %p210 = por %p208, %p209
      %p211 = scmp.ne.s32.totalorder %s199, %s200
      %p212 = scmp.eq.s32.totalorder %s22, 1
      %p213 = por %p211, %p212
      %p215 = scmp.ne.s32.totalorder %s200, %s214
      %p216 = scmp.eq.s32.totalorder %s22, 0
      %p217 = por %p215, %p216
      %s218 = ssub.s32 %s16, %s23
      %p219 = scmp.eq.s32.totalorder %s218, 0
      %s221 = sadd.s32 %s220, 1
      %s222 = scalar_select %p219, %s220, %s221
      %p225 = pneg %p219
      %p226 = scmp.eq.s32.totalorder %s16, 1
      %p227 = por %p225, %p226
      %p228 = scmp.ne.s32.totalorder %s220, %s223
      %p229 = scmp.eq.s32.totalorder %s16, 0
      %p230 = por %p228, %p229
      %p231 = scmp.ne.s32.totalorder %s220, %s223
      %p232 = scmp.eq.s32.totalorder %s21, 1
      %p233 = por %p231, %p232
      %p234 = scmp.ne.s32.totalorder %s223, %s224
      %p235 = scmp.eq.s32.totalorder %s21, 0
      %p236 = por %p234, %p235
      %p237 = scmp.ne.s32.totalorder %s223, %s224
      %p238 = scmp.eq.s32.totalorder %s22, 1
      %p239 = por %p237, %p238
      %p241 = scmp.ne.s32.totalorder %s224, %s240
      %p242 = scmp.eq.s32.totalorder %s22, 0
      %p243 = por %p241, %p242
      %p244 = scmp.le.s32.totalorder 1, %s16
      %p245 = scmp.lt.s32.totalorder %s16, 3
      %p246 = pnand %p244, %p245
      %p247 = pneg %p246
      // Predicated region
      $region9: #{tpu_custom_call.1} parent=5 // pred_check
        _
      $region10: #{tpu_custom_call.1} parent=5 // pred_check_branch
        %249 = sbr.rel (%p246) target = $region12
      $region11: #{tpu_custom_call.1} parent=5 // pred_region
        %s250 = ssub.s32 %s16, 1
        // Predicated region
        $region13: #{tpu_custom_call.1} parent=11 // pred_check
          %p251 = pneg %p63
        $region14: #{tpu_custom_call.1} parent=11 // pred_check_branch
          %253 = sbr.rel (%p251) target = $region16
        $region15: #{tpu_custom_call.1} parent=11 // pred_region
          %255 = vsyncadd [#allocation3], 0
          %s256 = sshll.u32 %s1, 4
          %s257 = int_to_ptr.hbm [resolvable:$true] %s256
          %s258 = sshll.u32 [#allocation2], 4
          %s259 = int_to_ptr.vmem [resolvable:$true] %s258
          %264 = dma.hbm_to_vmem [thread:$0]  %s257, 256, %s259, [#allocation3], 64, 64, 4
        $region16: #{tpu_custom_call.1} parent=11 // pred_fallthru
          _
        // Predicated region
        $region17: #{tpu_custom_call.1} parent=11 // pred_check
          %p265 = pneg %p84
        $region18: #{tpu_custom_call.1} parent=11 // pred_check_branch
          %267 = sbr.rel (%p265) target = $region20
        $region19: #{tpu_custom_call.1} parent=11 // pred_region
          _
        $region20: #{tpu_custom_call.1} parent=11 // pred_fallthru
          _
        // Predicated region
        $region21: #{tpu_custom_call.1} parent=11 // pred_check
          %p268 = pneg %p105
        $region22: #{tpu_custom_call.1} parent=11 // pred_check_branch
          %270 = sbr.rel (%p268) target = $region24
        $region23: #{tpu_custom_call.1} parent=11 // pred_region
          _
        $region24: #{tpu_custom_call.1} parent=11 // pred_fallthru
          _
        // Predicated region
        $region25: #{tpu_custom_call.1} parent=11 // pred_check
          %p271 = pneg %p126
        $region26: #{tpu_custom_call.1} parent=11 // pred_check_branch
          %273 = sbr.rel (%p271) target = $region28
        $region27: #{tpu_custom_call.1} parent=11 // pred_region
          _
        $region28: #{tpu_custom_call.1} parent=11 // pred_fallthru
          _
        // Predicated region
        $region29: #{tpu_custom_call.1} parent=11 // pred_check
          %p274 = pneg %p147
        $region30: #{tpu_custom_call.1} parent=11 // pred_check_branch
          %276 = sbr.rel (%p274) target = $region32
        $region31: #{tpu_custom_call.1} parent=11 // pred_region
          _
        $region32: #{tpu_custom_call.1} parent=11 // pred_fallthru
          _
        // Predicated region
        $region33: #{tpu_custom_call.1} parent=11 // pred_check
          %p277 = pneg %p168
        $region34: #{tpu_custom_call.1} parent=11 // pred_check_branch
          %279 = sbr.rel (%p277) target = $region36
        $region35: #{tpu_custom_call.1} parent=11 // pred_region
          _
        $region36: #{tpu_custom_call.1} parent=11 // pred_fallthru
          _
        // Predicated region
        $region37: #{tpu_custom_call.1} parent=11 // pred_check
          %p280 = pneg %p189
        $region38: #{tpu_custom_call.1} parent=11 // pred_check_branch
          %282 = sbr.rel (%p280) target = $region40
        $region39: #{tpu_custom_call.1} parent=11 // pred_region
          _
        $region40: #{tpu_custom_call.1} parent=11 // pred_fallthru
          _
        // Predicated region
        $region41: #{tpu_custom_call.1} parent=11 // pred_check
          %p283 = pneg %p210
        $region42: #{tpu_custom_call.1} parent=11 // pred_check_branch
          %285 = sbr.rel (%p283) target = $region44
        $region43: #{tpu_custom_call.1} parent=11 // pred_region
          _
        $region44: #{tpu_custom_call.1} parent=11 // pred_fallthru
          _
      $region12: #{tpu_custom_call.1} parent=5 // pred_fallthru
        _
      %p286 = scmp.lt.s32.totalorder %s16, 2
      // Predicated region
      $region45: #{tpu_custom_call.1} parent=5 // pred_check
        %p287 = pneg %p286
      $region46: #{tpu_custom_call.1} parent=5 // pred_check_branch
        %289 = sbr.rel (%p287) target = $region48
      $region47: #{tpu_custom_call.1} parent=5 // pred_region
        // Predicated region
        $region49: #{tpu_custom_call.1} parent=47 // pred_check
          %p290 = pneg %p36
        $region50: #{tpu_custom_call.1} parent=47 // pred_check_branch
          %292 = sbr.rel (%p290) target = $region52
        $region51: #{tpu_custom_call.1} parent=47 // pred_region
          %s293 = smul.u32 2, %s16
          %s294 = ssub.s32 3, %s293
          %p295 = scmp.lt.s32.totalorder %s294, 2
          %s296 = scalar_select %p295, %s294, 2
          %s297 = smul.u32 8, %s296
          %p298 = scmp.lt.s32.totalorder %s293, 2
          %s299 = scalar_select %p298, %s293, 2
          %s300 = smul.addr %s299, 8
          %s301 = scalar_lea.vmem %s0, %s300
          %s302 = smul.u32 2, %s16
          %s303 = ssub.s32 3, %s302
          %p304 = scmp.lt.s32.totalorder %s303, 2
          %s305 = scalar_select %p304, %s303, 2
          %s306 = smul.u32 8, %s305
        $region52: #{tpu_custom_call.1} parent=47 // pred_fallthru
          _
      $region48: #{tpu_custom_call.1} parent=5 // pred_fallthru
        _
      %p307 = scmp.le.s32.totalorder 1, %s16
      %p308 = scmp.lt.s32.totalorder %s16, 3
      %p309 = pnand %p307, %p308
      %p310 = pneg %p309
      // Predicated region
      $region53: #{tpu_custom_call.1} parent=5 // pred_check
        _
      $region54: #{tpu_custom_call.1} parent=5 // pred_check_branch
        %312 = sbr.rel (%p309) target = $region56
      $region55: #{tpu_custom_call.1} parent=5 // pred_region
        %s313 = ssub.s32 %s16, 1
        // Predicated region
        $region57: #{tpu_custom_call.1} parent=55 // pred_check
          %p314 = pneg %p63
        $region58: #{tpu_custom_call.1} parent=55 // pred_check_branch
          %316 = sbr.rel (%p314) target = $region60
        $region59: #{tpu_custom_call.1} parent=55 // pred_region
          %318 = dma.done [#allocation3], 256
        $region60: #{tpu_custom_call.1} parent=55 // pred_fallthru
          _
        %s319 = smul.u32 2, %s21
        %s320 = ssub.s32 3, %s319
        %p321 = scmp.lt.s32.totalorder %s320, 2
        %s322 = scalar_select %p321, %s320, 2
        %s323 = smul.u32 8, %s322
        %p324 = scmp.lt.s32.totalorder %s319, 2
        %s325 = scalar_select %p324, %s319, 2
        %s326 = smul.addr %s325, 8
        %s327 = scalar_lea.vmem %s0, %s326
        %p328 = pneg %p42
        %p329 = pneg %p39
        %p330 = pneg %p63
        %p331 = pneg %p60
        %p332 = pneg %p84
        %p333 = pneg %p81
        %p334 = pneg %p105
        %p335 = pneg %p102
        %p336 = pneg %p126
        %p337 = pneg %p123
        %p338 = pneg %p147
        %p339 = pneg %p144
        %p340 = pneg %p168
        %p341 = pneg %p165
        %p342 = pneg %p189
        %p343 = pneg %p186
        %p344 = pneg %p210
        %p345 = pneg %p207
        %p346 = pneg %p236
        %p347 = pneg %p233
        %s348 = sand.u32 %s223, 1
        %s349 = sand.u32 %s223, 1
        %s350 = smul.addr %s349, 16
        %s351 = scalar_lea.vmem [#allocation4], %s350
        %s352 = smul.u32 2, %s21
        %s353 = ssub.s32 3, %s352
        %p354 = scmp.lt.s32.totalorder %s353, 2
        %s355 = scalar_select %p354, %s353, 2
        %s356 = smul.u32 8, %s355
        %p357 = scmp.lt.s32.totalorder %s352, 2
        %s358 = scalar_select %p357, %s352, 2
        %s359 = smul.addr %s358, 8
        %s360 = scalar_lea.vmem %s0, %s359
        %s361 = smul.u32 2, %s21
        %s362 = ssub.s32 3, %s361
        %p363 = scmp.lt.s32.totalorder %s362, 2
        %s364 = scalar_select %p363, %s362, 2
        %s365 = smul.u32 8, %s364
        %s366 = smul.u32 2, %s21
        %s367 = ssub.s32 3, %s366
        %p368 = scmp.lt.s32.totalorder %s367, 2
        %s369 = scalar_select %p368, %s367, 2
        %s370 = smul.u32 8, %s369
        %v372 = vld [vmem:[%s360] sm:$0xff]
        %v373 = vld [vmem:[%s360 + $0x8] sm:$0xff]
        %v374 = vpack.c.bf16 %v373, %v372
        %v375 = vld [vmem:[#allocation2] sm:$0xf]
        %v376 = vld [vmem:[#allocation2 + $0x4] sm:$0xf]
        %v377 = vld [vmem:[#allocation2 + $0x8] sm:$0xf]
        %v378 = vld [vmem:[#allocation2 + $0xc] sm:$0xf]
        %v379 = vld [vmem:[%s2] sm:$0x1]
        %v381 = vperm.slane %v379, 0
        %v387 = vunpack.c.l.b16 %v375
        %v388 = vunpack.c.l.b16 %v376
        %v389 = vunpack.c.l.b16 %v377
        %v390 = vunpack.c.l.b16 %v378
        %v391 = vpack.c.b16 %v388, %v387
        %v392 = vpack.c.b16 %v390, %v389
        %vm395 = vcmask 261120
        %v397 = vsel %vm395, %v374, 0
        %399 = vmatpush.bf16.msra.mxu0 0
        %400 = vmatpush.bf16.msra.mxu0 0
        %401 = vmatpush.bf16.msra.mxu0 0
        %402 = vmatpush.bf16.msra.mxu0 0
        %403 = vmatpush.bf16.msra.mxu0 0
        %404 = vmatpush.bf16.msra.mxu0 0
        %405 = vmatpush.bf16.msra.mxu0 %v392
        %406 = vmatpush.bf16.msra.mxu0 %v391
        %407 = vmatmul.bf16.gmra.mxu0 %v397
        %v408 = vpop.f32.mrf.mxu0
        %v409 = vadd.f32 %v381, %v408
        %v410 = vpop.f32.mrf.mxu0
        %v411 = vadd.f32 %v381, %v410
        %412 = vdwg.mxu0
        %v413 = vmax.f32 %v409, 0.0
        %v414 = vmax.f32 %v411, 0.0
        %v415 = vpack.c.bf16 %v414, %v413
        %v416 = vld [vmem:[%s3] sm:$0xf]
        %v417 = vld [vmem:[%s3 + $0x4] sm:$0xf]
        %v418 = vld [vmem:[%s3 + $0x8] sm:$0xf]
        %v419 = vld [vmem:[%s3 + $0xc] sm:$0xf]
        %v420 = vld [vmem:[%s3 + $0x10] sm:$0xf]
        %v421 = vld [vmem:[%s3 + $0x14] sm:$0xf]
        %v422 = vld [vmem:[%s3 + $0x18] sm:$0xf]
        %v423 = vld [vmem:[%s3 + $0x1c] sm:$0xf]
        %v424 = vld [vmem:[%s4] sm:$0x1]
        %v426 = vperm.slane %v424, 0
        %v436 = vunpack.c.l.b16 %v416
        %v437 = vunpack.c.l.b16 %v417
        %v438 = vunpack.c.l.b16 %v418
        %v439 = vunpack.c.l.b16 %v419
        %v440 = vunpack.c.l.b16 %v420
        %v441 = vunpack.c.l.b16 %v421
        %v442 = vunpack.c.l.b16 %v422
        %v443 = vunpack.c.l.b16 %v423
        %v444 = vpack.c.b16 %v437, %v436
        %v445 = vpack.c.b16 %v439, %v438
        %v446 = vpack.c.b16 %v441, %v440
        %v447 = vpack.c.b16 %v443, %v442
        %vm452 = vcmask 523264
        %v454 = vsel %vm452, %v415, 0
        %456 = vmatpush.bf16.msra.mxu0 0
        %457 = vmatpush.bf16.msra.mxu0 0
        %458 = vmatpush.bf16.msra.mxu0 0
        %459 = vmatpush.bf16.msra.mxu0 0
        %460 = vmatpush.bf16.msra.mxu0 %v447
        %461 = vmatpush.bf16.msra.mxu0 %v446
        %462 = vmatpush.bf16.msra.mxu0 %v445
        %463 = vmatpush.bf16.msra.mxu0 %v444
        %464 = vmatmul.bf16.gmra.mxu0 %v454
        %v465 = vpop.f32.mrf.mxu0
        %v466 = vadd.f32 %v426, %v465
        %v467 = vpop.f32.mrf.mxu0
        %v468 = vadd.f32 %v426, %v467
        %469 = vdwg.mxu0
        %v470 = vmax.f32 %v466, 0.0
        %v471 = vmax.f32 %v468, 0.0
        %v472 = vpack.c.bf16 %v471, %v470
        %v473 = vld [vmem:[%s5] sm:$0xf]
        %v474 = vld [vmem:[%s5 + $0x4] sm:$0xf]
        %v475 = vld [vmem:[%s5 + $0x8] sm:$0xf]
        %v476 = vld [vmem:[%s5 + $0xc] sm:$0xf]
        %v477 = vld [vmem:[%s5 + $0x10] sm:$0xf]
        %v478 = vld [vmem:[%s5 + $0x14] sm:$0xf]
        %v479 = vld [vmem:[%s5 + $0x18] sm:$0xf]
        %v480 = vld [vmem:[%s5 + $0x1c] sm:$0xf]
        %v481 = vld [vmem:[%s6] sm:$0x1]
        %v483 = vperm.slane %v481, 0
        %v493 = vunpack.c.l.b16 %v473
        %v494 = vunpack.c.l.b16 %v474
        %v495 = vunpack.c.l.b16 %v475
        %v496 = vunpack.c.l.b16 %v476
        %v497 = vunpack.c.l.b16 %v477
        %v498 = vunpack.c.l.b16 %v478
        %v499 = vunpack.c.l.b16 %v479
        %v500 = vunpack.c.l.b16 %v480
        %v501 = vpack.c.b16 %v494, %v493
        %v502 = vpack.c.b16 %v496, %v495
        %v503 = vpack.c.b16 %v498, %v497
        %v504 = vpack.c.b16 %v500, %v499
        %v510 = vsel %vm452, %v472, 0
        %512 = vmatpush.bf16.msra.mxu0 0
        %513 = vmatpush.bf16.msra.mxu0 0
        %514 = vmatpush.bf16.msra.mxu0 0
        %515 = vmatpush.bf16.msra.mxu0 0
        %516 = vmatpush.bf16.msra.mxu0 %v504
        %517 = vmatpush.bf16.msra.mxu0 %v503
        %518 = vmatpush.bf16.msra.mxu0 %v502
        %519 = vmatpush.bf16.msra.mxu0 %v501
        %520 = vmatmul.bf16.gmra.mxu0 %v510
        %v521 = vpop.f32.mrf.mxu0
        %v522 = vadd.f32 %v483, %v521
        %v523 = vpop.f32.mrf.mxu0
        %v524 = vadd.f32 %v483, %v523
        %525 = vdwg.mxu0
        %v526 = vmax.f32 %v522, 0.0
        %v527 = vmax.f32 %v524, 0.0
        %v528 = vpack.c.bf16 %v527, %v526
        %v529 = vld [vmem:[%s7] sm:$0xf]
        %v530 = vld [vmem:[%s7 + $0x4] sm:$0xf]
        %v531 = vld [vmem:[%s7 + $0x8] sm:$0xf]
        %v532 = vld [vmem:[%s7 + $0xc] sm:$0xf]
        %v533 = vld [vmem:[%s8] sm:$0x1]
        %v535 = vperm.slane %v533, 0
        %v541 = vunpack.c.l.b16 %v529
        %v542 = vunpack.c.l.b16 %v530
        %v543 = vunpack.c.l.b16 %v531
        %v544 = vunpack.c.l.b16 %v532
        %v545 = vpack.c.b16 %v542, %v541
        %v546 = vpack.c.b16 %v544, %v543
        %v550 = vsel %vm395, %v528, 0
        %552 = vmatpush.bf16.msra.mxu0 0
        %553 = vmatpush.bf16.msra.mxu0 0
        %554 = vmatpush.bf16.msra.mxu0 0
        %555 = vmatpush.bf16.msra.mxu0 0
        %556 = vmatpush.bf16.msra.mxu0 0
        %557 = vmatpush.bf16.msra.mxu0 0
        %558 = vmatpush.bf16.msra.mxu0 %v546
        %559 = vmatpush.bf16.msra.mxu0 %v545
        %560 = vmatmul.bf16.gmra.mxu0 %v550
        %v561 = vpop.f32.mrf.mxu0
        %v562 = vadd.f32 %v535, %v561
        %v563 = vpop.f32.mrf.mxu0
        %v564 = vadd.f32 %v535, %v563
        %565 = vdwg.mxu0
        %vm566 = vcmask 80896
        %567 = vst.msk [vmem:[%s351] sm:$0xff] %vm566, %v562
        %568 = vst.msk [vmem:[%s351 + $0x8] sm:$0xff] %vm566, %v564
        %s569 = sand.u32 %s223, 1
        %s570 = sand.u32 %s223, 1
        %s571 = smul.addr %s570, 16
        %s572 = scalar_lea.vmem [#allocation4], %s571
        // Predicated region
        $region61: #{tpu_custom_call.1} parent=55 // pred_check
          %p573 = pneg %p233
        $region62: #{tpu_custom_call.1} parent=55 // pred_check_branch
          %575 = sbr.rel (%p573) target = $region64
        $region63: #{tpu_custom_call.1} parent=55 // pred_region
          %s576 = smul.u32 2, %s21
          %s577 = ssub.s32 3, %s576
          %p578 = scmp.lt.s32.totalorder %s577, 2
          %s579 = scalar_select %p578, %s577, 2
          %s580 = smul.u32 8, %s579
          %p581 = scmp.ne.s32.totalorder 0, %s580
          %s582 = smul.addr %s576, 8
          %s583 = scalar_lea.vmem %s9, %s582
          // Predicated region
          $region65: #{tpu_custom_call.1} parent=63 // pred_check
            %p584 = pneg %p581
          $region66: #{tpu_custom_call.1} parent=63 // pred_check_branch
            %586 = sbr.rel (%p584) target = $region68
          $region67: #{tpu_custom_call.1} parent=63 // pred_region
            // Predicated region
            $region69: #{tpu_custom_call.1} parent=67 // pred_check
              _
            $region70: #{tpu_custom_call.1} parent=67 // pred_check_branch
              %588 = sbr.rel (0) target = $region72
            $region71: #{tpu_custom_call.1} parent=67 // pred_region
              // Predicated region
              $region91: #{tpu_custom_call.1} parent=71 // pred_check
                _
              $region92: #{tpu_custom_call.1} parent=71 // pred_check_branch
                %640 = sbr.rel (0) target = $region94
              $region93: #{tpu_custom_call.1} parent=71 // pred_region
                %s641 = sshrl.u32 %s579, 1
                // While loop
                $region95: #{tpu_custom_call.1} parent=93 // loop_pre_header
                  _
                $region96: #{tpu_custom_call.1} parent=93 // loop_header
                  %s643 = sphi 0, %s645
                  %p644 = scmp.ge.s32.totalorder %s643, %s641
                  %s648 = sphi 0, %s657
                  %s649 = sphi %s572, %s660
                  %s650 = sphi %s583, %s661
                $region97: #{tpu_custom_call.1} parent=93 // loop_header_branch
                  %647 = sbr.rel (%p644) target = $region101
                $region98: #{tpu_custom_call.1} parent=93 // loop_body
                  %v651 = vld [vmem:[%s649] sm:$0xff]
                  %652 = vst [vmem:[%s650] sm:$0xff] %v651
                  %v653 = vld [vmem:[%s649 + $0x8] sm:$0xff]
                  %654 = vst [vmem:[%s650 + $0x8] sm:$0xff] %v653
                  %s655 = sadd.s32 1, %s648
                  %p656 = scmp.ge.s32.totalorder %s655, %s641
                  %s657 = scalar_select %p656, 0, %s655
                  %s658 = smul.u32 %s657, 16
                  %s659 = smul.u32 %s657, 16
                  %s660 = scalar_lea.vmem %s572, %s658 [#allocation4]
                  %s661 = scalar_lea.vmem %s583, %s659
                $region99: #{tpu_custom_call.1} parent=93 // loop_footer
                  %s645 = sadd.s32 %s643, 1
                $region100: #{tpu_custom_call.1} parent=93 // loop_footer_branch
                  %642 = sbr.rel target = $region96
                $region101: #{tpu_custom_call.1} parent=93 // loop_exit
                  _
                %s662 = sshrl.u32 %s579, 1
                %s663 = sand.u32 %s579, 1
                %s664 = smul.u32 %s662, 2
                %s665 = smul.u32 8, %s664
                %s666 = scalar_lea.vmem %s572, %s665 [#allocation4]
                %s667 = smul.u32 8, %s664
                %s668 = scalar_lea.vmem %s583, %s667
                // While loop
                $region102: #{tpu_custom_call.1} parent=93 // loop_pre_header
                  _
                $region103: #{tpu_custom_call.1} parent=93 // loop_header
                  %s670 = sphi 0, %s672
                  %p671 = scmp.ge.s32.totalorder %s670, %s663
                  %s675 = sphi 0, %s682
                  %s676 = sphi %s666, %s685
                  %s677 = sphi %s668, %s686
                $region104: #{tpu_custom_call.1} parent=93 // loop_header_branch
                  %674 = sbr.rel (%p671) target = $region108
                $region105: #{tpu_custom_call.1} parent=93 // loop_body
                  %v678 = vld [vmem:[%s676] sm:$0xff]
                  %679 = vst [vmem:[%s677] sm:$0xff] %v678
                  %s680 = sadd.s32 1, %s675
                  %p681 = scmp.ge.s32.totalorder %s680, %s663
                  %s682 = scalar_select %p681, 0, %s680
                  %s683 = smul.u32 %s682, 8
                  %s684 = smul.u32 %s682, 8
                  %s685 = scalar_lea.vmem %s666, %s683 [#allocation4]
                  %s686 = scalar_lea.vmem %s668, %s684
                $region106: #{tpu_custom_call.1} parent=93 // loop_footer
                  %s672 = sadd.s32 %s670, 1
                $region107: #{tpu_custom_call.1} parent=93 // loop_footer_branch
                  %669 = sbr.rel target = $region103
                $region108: #{tpu_custom_call.1} parent=93 // loop_exit
                  _
              $region94: #{tpu_custom_call.1} parent=71 // pred_fallthru
                _
              // Predicated region
              $region109: #{tpu_custom_call.1} parent=71 // pred_check
                _
              $region110: #{tpu_custom_call.1} parent=71 // pred_check_branch
                %688 = sbr.rel target = $region112
              $region111: #{tpu_custom_call.1} parent=71 // pred_region
                _
              $region112: #{tpu_custom_call.1} parent=71 // pred_fallthru
                _
            $region72: #{tpu_custom_call.1} parent=67 // pred_fallthru
              _
            // Predicated region
            $region73: #{tpu_custom_call.1} parent=67 // pred_check
              _
            $region74: #{tpu_custom_call.1} parent=67 // pred_check_branch
              %590 = sbr.rel target = $region76
            $region75: #{tpu_custom_call.1} parent=67 // pred_region
              %s592 = ssub.s32 256, 1
              %s593 = sshrl.u32 %s579, 1
              // While loop
              $region77: #{tpu_custom_call.1} parent=75 // loop_pre_header
                _
              $region78: #{tpu_custom_call.1} parent=75 // loop_header
                %s595 = sphi 0, %s597
                %p596 = scmp.ge.s32.totalorder %s595, %s593
                %s600 = sphi 0, %s609
                %s601 = sphi %s572, %s612
                %s602 = sphi %s583, %s613
              $region79: #{tpu_custom_call.1} parent=75 // loop_header_branch
                %599 = sbr.rel (%p596) target = $region83
              $region80: #{tpu_custom_call.1} parent=75 // loop_body
                %v603 = vld [vmem:[%s601] sm:%s592]
                %604 = vst [vmem:[%s602] sm:%s592] %v603
                %v605 = vld [vmem:[%s601 + $0x8] sm:%s592]
                %606 = vst [vmem:[%s602 + $0x8] sm:%s592] %v605
                %s607 = sadd.s32 1, %s600
                %p608 = scmp.ge.s32.totalorder %s607, %s593
                %s609 = scalar_select %p608, 0, %s607
                %s610 = smul.u32 %s609, 16
                %s611 = smul.u32 %s609, 16
                %s612 = scalar_lea.vmem %s572, %s610 [#allocation4]
                %s613 = scalar_lea.vmem %s583, %s611
              $region81: #{tpu_custom_call.1} parent=75 // loop_footer
                %s597 = sadd.s32 %s595, 1
              $region82: #{tpu_custom_call.1} parent=75 // loop_footer_branch
                %594 = sbr.rel target = $region78
              $region83: #{tpu_custom_call.1} parent=75 // loop_exit
                _
              %s614 = sshrl.u32 %s579, 1
              %s615 = sand.u32 %s579, 1
              %s616 = smul.u32 %s614, 2
              %s617 = smul.u32 8, %s616
              %s618 = scalar_lea.vmem %s572, %s617 [#allocation4]
              %s619 = smul.u32 8, %s616
              %s620 = scalar_lea.vmem %s583, %s619
              // While loop
              $region84: #{tpu_custom_call.1} parent=75 // loop_pre_header
                _
              $region85: #{tpu_custom_call.1} parent=75 // loop_header
                %s622 = sphi 0, %s624
                %p623 = scmp.ge.s32.totalorder %s622, %s615
                %s627 = sphi 0, %s634
                %s628 = sphi %s618, %s637
                %s629 = sphi %s620, %s638
              $region86: #{tpu_custom_call.1} parent=75 // loop_header_branch
                %626 = sbr.rel (%p623) target = $region90
              $region87: #{tpu_custom_call.1} parent=75 // loop_body
                %v630 = vld [vmem:[%s628] sm:%s592]
                %631 = vst [vmem:[%s629] sm:%s592] %v630
                %s632 = sadd.s32 1, %s627
                %p633 = scmp.ge.s32.totalorder %s632, %s615
                %s634 = scalar_select %p633, 0, %s632
                %s635 = smul.u32 %s634, 8
                %s636 = smul.u32 %s634, 8
                %s637 = scalar_lea.vmem %s618, %s635 [#allocation4]
                %s638 = scalar_lea.vmem %s620, %s636
              $region88: #{tpu_custom_call.1} parent=75 // loop_footer
                %s624 = sadd.s32 %s622, 1
              $region89: #{tpu_custom_call.1} parent=75 // loop_footer_branch
                %621 = sbr.rel target = $region85
              $region90: #{tpu_custom_call.1} parent=75 // loop_exit
                _
            $region76: #{tpu_custom_call.1} parent=67 // pred_fallthru
              _
          $region68: #{tpu_custom_call.1} parent=63 // pred_fallthru
            _
          %689 = vnop
        $region64: #{tpu_custom_call.1} parent=55 // pred_fallthru
          _
      $region56: #{tpu_custom_call.1} parent=5 // pred_fallthru
        _
      %p690 = scmp.le.s32.totalorder 2, %s16
      // Predicated region
      $region113: #{tpu_custom_call.1} parent=5 // pred_check
        %p691 = pneg %p690
      $region114: #{tpu_custom_call.1} parent=5 // pred_check_branch
        %693 = sbr.rel (%p691) target = $region116
      $region115: #{tpu_custom_call.1} parent=5 // pred_region
        %s694 = ssub.s32 %s16, 2
        // Predicated region
        $region117: #{tpu_custom_call.1} parent=115 // pred_check
          %p695 = pneg %p239
        $region118: #{tpu_custom_call.1} parent=115 // pred_check_branch
          %697 = sbr.rel (%p695) target = $region120
        $region119: #{tpu_custom_call.1} parent=115 // pred_region
          %s698 = sand.u32 %s224, 1
          %s699 = sand.u32 %s224, 1
          %s700 = smul.addr %s699, 16
          %s701 = scalar_lea.vmem [#allocation4], %s700
        $region120: #{tpu_custom_call.1} parent=115 // pred_fallthru
          _
      $region116: #{tpu_custom_call.1} parent=5 // pred_fallthru
        _
    $region6: #{tpu_custom_call.1} parent=1 // loop_footer
      %s20 = sadd.s32 1, %s16
    $region7: #{tpu_custom_call.1} parent=1 // loop_footer_branch
      %15 = sbr.rel target = $region3
    $region8: #{tpu_custom_call.1} parent=1 // loop_exit
      _
    %702 = vsyncpa [#allocation3], 1
    %s703 = scalar_lea.sflag [#allocation3], 1
    %704 = vsyncpa %s703, 1

</llo_original>
